<compile_context>
chip_gen: v6e
topology: v6e:2x2x1
jax: 0.10.0
libtpu: 0.0.40
codegen_flags: <defaults>
</compile_context>

<pallas_src>
import functools

import jax
import jax.numpy as jnp
from jax.experimental import pallas as pl
from jax.experimental.pallas import tpu as pltpu


_PIPELINE_BUDGET_BYTES = 24 * 1024 * 1024   # 3 inputs x 2 pipeline buffers
_MAX_TB = 4096                              # row cap (review: lift the 1024 cap)
_VMEM_LIMIT_CAP = 56 * 1024 * 1024          # stay under v7x's 64 MiB / TC


def _triplet_loss_kernel(za_ref, zp_ref, zn_ref, out_ref, acc_ref, *,
                         m1, batch, tile_b, tiles_per_split):
    c = pl.program_id(0)   # split index (per-TensorCore on dual-TC chips)
    i = pl.program_id(1)   # batch-tile index within the split ("arbitrary")

    # ---- init accumulator at the start of each split's reduction ----
    @pl.when(i == 0)
    def _():
        acc_ref[...] = jnp.zeros_like(acc_ref)

    a = za_ref[...].astype(jnp.float32)
    p = zp_ref[...].astype(jnp.float32)
    n = zn_ref[...].astype(jnp.float32)

    # d_ap - d_an == sum((p - n) * (p + n - 2a), axis=1): single fused
    # per-row reduction instead of two.
    diff = jnp.sum((p - n) * (p + n - 2.0 * a), axis=1, keepdims=True)  # (TB,1)
    hinge = jnp.maximum(diff + m1, 0.0)                                 # (TB,1)

    # Mask rows past the true batch (partial trailing tile).
    global_tile = c * tiles_per_split + i
    rows_remaining = batch - global_tile * tile_b
    row_ids = jax.lax.broadcasted_iota(jnp.int32, hinge.shape, 0)
    hinge = jnp.where(row_ids < rows_remaining, hinge, 0.0)

    acc_ref[...] += jnp.sum(hinge, axis=0, keepdims=True)

    # ---- finalize: each split writes its partial mean exactly once ----
    @pl.when(i == tiles_per_split - 1)
    def _():
        out_ref[...] = (acc_ref[...] * (1.0 / batch)).reshape(out_ref.shape)


def _sublane_align(itemsize):
    # Native packed sublane tile: 8 rows f32, 16 rows bf16, 32 rows int8/fp8.
    return 8 * max(1, 4 // max(1, int(itemsize)))


def _tensorcores_per_device():
    """Best-effort TensorCore count of the default device (1 if unknown)."""
    try:
        d = jax.devices()[0]
    except Exception:
        return 1
    if getattr(d, "platform", "") != "tpu":
        return 1
    kind = str(getattr(d, "device_kind", "")).lower()
    # Dual-TensorCore / megacore parts; v5e and v6e are single-TC.
    if any(tag in kind for tag in ("v7", "7x", "v5p", "v4")):
        return 2
    return 1


def _pick_batch_tile(B, D, itemsize):
    align = _sublane_align(itemsize)
    per_row = 3 * 2 * D * itemsize            # 3 inputs x double buffer
    tb = _PIPELINE_BUDGET_BYTES // max(1, per_row)
    tb = max(align, min(_MAX_TB, int(tb)))
    tb = (tb // align) * align                # dtype-aware sublane alignment
    if B <= tb:
        return B                              # single full-batch tile
    return tb


def triplet_loss(z_a, z_p, z_n, m1=1.0, *, tile_b=None, num_splits=None):
    """Pallas TPU implementation of Triplet_Loss.forward. Returns scalar f32."""
    assert z_a.shape == z_p.shape == z_n.shape
    assert z_a.dtype == z_p.dtype == z_n.dtype
    B, D = z_a.shape
    itemsize = jnp.dtype(z_a.dtype).itemsize
    align = _sublane_align(itemsize)

    TB = tile_b if tile_b is not None else _pick_batch_tile(B, D, itemsize)
    assert TB == B or TB % 8 == 0, "batch tile must be sublane-aligned or full batch"

    num_tiles = pl.cdiv(B, TB)
    cores = _tensorcores_per_device()
    if num_splits is None:
        num_splits = 2 if (cores >= 2 and num_tiles >= 2) else 1

    # For a 2-way split choose TB so the tile count is even: no clamped
    # duplicate tile -> no redundant (TB, D) x 3 HBM re-read.
    if num_splits == 2 and num_tiles % 2 != 0 and tile_b is None:
        tb2 = TB
        while tb2 > align and pl.cdiv(B, tb2) % 2 != 0:
            tb2 -= align
        if pl.cdiv(B, tb2) % 2 == 0:
            TB = tb2
            num_tiles = pl.cdiv(B, TB)
    if num_splits == 2 and num_tiles % 2 != 0:
        num_splits = 1      # could not make it even; avoid the redundant read

    tiles_per_split = num_tiles // num_splits

    # Explicit scoped-VMEM limit sized from the actual pipeline footprint
    # (lifts v5e's 16 MiB default; stays well under v7x's 64 MiB per TC).
    pipeline_bytes = 3 * 2 * TB * D * itemsize
    vmem_limit = int(min(max(pipeline_bytes + (4 << 20), 16 << 20),
                         _VMEM_LIMIT_CAP))

    kernel = functools.partial(
        _triplet_loss_kernel,
        m1=float(m1), batch=B, tile_b=TB, tiles_per_split=tiles_per_split)

    def in_index(c, i):
        # Clamp defensively (never triggers with an even split, but keeps
        # any ragged configuration in-bounds; masked rows contribute zero).
        return (jnp.minimum(c * tiles_per_split + i, num_tiles - 1), 0)

    in_spec = pl.BlockSpec((TB, D), in_index)

    if num_splits >= 2:
        # Prefer true per-TensorCore sharding of the split axis (v7x);
        # fall back to plain "parallel" if CORE_PARALLEL is rejected.
        sem_candidates = [
            (pltpu.CORE_PARALLEL, pltpu.ARBITRARY),
            ("parallel", "arbitrary"),
        ]
    else:
        sem_candidates = [("arbitrary", "arbitrary")]

    last_err = None
    for sems in sem_candidates:
        try:
            partials = pl.pallas_call(
                kernel,
                out_shape=jax.ShapeDtypeStruct((num_splits, 1, 1), jnp.float32),
                grid_spec=pltpu.PrefetchScalarGridSpec(
                    num_scalar_prefetch=0,
                    grid=(num_splits, tiles_per_split),
                    in_specs=[in_spec, in_spec, in_spec],
                    out_specs=pl.BlockSpec((1, 1, 1), lambda c, i: (c, 0, 0)),
                    scratch_shapes=[pltpu.VMEM((1, 1), jnp.float32)],
                ),
                compiler_params=pltpu.CompilerParams(
                    dimension_semantics=sems,
                    vmem_limit_bytes=vmem_limit),
                cost_estimate=pl.CostEstimate(
                    flops=6 * B * D,
                    transcendentals=0,
                    bytes_accessed=3 * B * D * itemsize + num_splits * 4),
            )(z_a, z_p, z_n)
            # Combine per-split partial means (each already divided by true B).
            return jnp.sum(partials)
        except Exception as e:  # e.g. CORE_PARALLEL unsupported on this part
            last_err = e
    raise last_err


def triplet_loss_ref(z_a, z_p, z_n, m1=1.0):
    z_a = z_a.astype(jnp.float32)
    z_p = z_p.astype(jnp.float32)
    z_n = z_n.astype(jnp.float32)
    d_ap = jnp.sum((z_a - z_p) ** 2, axis=1)
    d_an = jnp.sum((z_a - z_n) ** 2, axis=1)
    return jnp.mean(jnp.maximum(d_ap - d_an + m1, 0.0))


if __name__ == "__main__":
    # --- check 1: small, tile-friendly shape (single tile, single split) ---
    k1, k2, k3 = jax.random.split(jax.random.PRNGKey(0), 3)
    B, D = 8, 128
    z_a = jax.random.normal(k1, (B, D), dtype=jnp.float32)
    z_p = jax.random.normal(k2, (B, D), dtype=jnp.float32)
    z_n = jax.random.normal(k3, (B, D), dtype=jnp.float32)

    loss = jax.block_until_ready(triplet_loss(z_a, z_p, z_n, m1=1.0))
    ref = jax.block_until_ready(triplet_loss_ref(z_a, z_p, z_n, m1=1.0))
    assert jnp.allclose(loss, ref, rtol=1e-5, atol=1e-5), (loss, ref)

    # --- check 2: ragged batch with a forced small tile -> exercises the
    #     tiled pipeline, the trailing partial tile and the row masking ---
    k4, k5, k6 = jax.random.split(jax.random.PRNGKey(1), 3)
    B2, D2 = 300, 256
    z_a2 = jax.random.normal(k4, (B2, D2), dtype=jnp.float32)
    z_p2 = jax.random.normal(k5, (B2, D2), dtype=jnp.float32)
    z_n2 = jax.random.normal(k6, (B2, D2), dtype=jnp.float32)

    loss2 = jax.block_until_ready(triplet_loss(z_a2, z_p2, z_n2, m1=1.0, tile_b=64))
    ref2 = jax.block_until_ready(triplet_loss_ref(z_a2, z_p2, z_n2, m1=1.0))
    assert jnp.allclose(loss2, ref2, rtol=1e-5, atol=1e-5), (loss2, ref2)

    # --- check 3: bf16 inputs (dtype-aware alignment path, upcast in-kernel) ---
    k7, k8, k9 = jax.random.split(jax.random.PRNGKey(2), 3)
    B3, D3 = 64, 128
    z_a3 = jax.random.normal(k7, (B3, D3), dtype=jnp.bfloat16)
    z_p3 = jax.random.normal(k8, (B3, D3), dtype=jnp.bfloat16)
    z_n3 = jax.random.normal(k9, (B3, D3), dtype=jnp.bfloat16)

    loss3 = jax.block_until_ready(triplet_loss(z_a3, z_p3, z_n3, m1=1.0))
    ref3 = jax.block_until_ready(triplet_loss_ref(z_a3, z_p3, z_n3, m1=1.0))
    assert jnp.allclose(loss3, ref3, rtol=1e-4, atol=1e-4), (loss3, ref3)

    print("KERNEL_OK")
</pallas_src>

<mosaic_0001>
module attributes {stable_mosaic.version = 11 : i64} {
  func.func @_triplet_loss_kernel(%arg0: i32, %arg1: i32, %arg2: memref<8x128xf32, #tpu.memory_space<vmem>>, %arg3: memref<8x128xf32, #tpu.memory_space<vmem>>, %arg4: memref<8x128xf32, #tpu.memory_space<vmem>>, %arg5: memref<1x1x1xf32, #tpu.memory_space<vmem>>, %arg6: memref<1x1xf32, #tpu.memory_space<vmem>>) attributes {dimension_semantics = [#tpu.dimension_semantics<arbitrary>, #tpu.dimension_semantics<arbitrary>], iteration_bounds = array<i64: 1, 1>, scalar_prefetch = 0 : i64, scratch_operands = 1 : i64, tpu.core_type = #tpu.core_type<tc>, window_params = [{transform_indices = @transform_0, window_bounds = array<i64: 8, 128>}, {transform_indices = @transform_1, window_bounds = array<i64: 8, 128>}, {transform_indices = @transform_2, window_bounds = array<i64: 8, 128>}, {transform_indices = @transform_3, window_bounds = array<i64: 1, 1, 1>}]} {
    %c0_i32 = arith.constant 0 : i32
    %0 = arith.cmpi eq, %arg1, %c0_i32 : i32
    %1 = arith.extui %0 : i1 to i32
    %c0_i32_0 = arith.constant 0 : i32
    %2 = arith.cmpi ne, %1, %c0_i32_0 : i32
    scf.if %2 {
      %cst_18 = arith.constant 0.000000e+00 : f32
      %35 = vector.broadcast %cst_18 : f32 to vector<1x1xf32>
      %c0_19 = arith.constant 0 : index
      %c0_20 = arith.constant 0 : index
      %36 = vector.load %arg6[%c0_19, %c0_20] : memref<1x1xf32, #tpu.memory_space<vmem>>, vector<1x1xf32>
      tpu.vector_store %arg6[%c0_19, %c0_20], %35 {strides = array<i32>} : memref<1x1xf32, #tpu.memory_space<vmem>>, vector<1x1xf32>,
    } else {
    }
    %c0 = arith.constant 0 : index
    %c0_1 = arith.constant 0 : index
    %3 = vector.load %arg2[%c0, %c0_1] : memref<8x128xf32, #tpu.memory_space<vmem>>, vector<8x128xf32>
    %c0_2 = arith.constant 0 : index
    %c0_3 = arith.constant 0 : index
    %4 = vector.load %arg3[%c0_2, %c0_3] : memref<8x128xf32, #tpu.memory_space<vmem>>, vector<8x128xf32>
    %c0_4 = arith.constant 0 : index
    %c0_5 = arith.constant 0 : index
    %5 = vector.load %arg4[%c0_4, %c0_5] : memref<8x128xf32, #tpu.memory_space<vmem>>, vector<8x128xf32>
    %6 = arith.subf %4, %5 : vector<8x128xf32>
    %7 = arith.addf %4, %5 : vector<8x128xf32>
    %cst = arith.constant 2.000000e+00 : f32
    %8 = vector.broadcast %cst : f32 to vector<8x128xf32>
    %9 = arith.mulf %8, %3 : vector<8x128xf32>
    %10 = arith.subf %7, %9 : vector<8x128xf32>
    %11 = arith.mulf %6, %10 : vector<8x128xf32>
    %cst_6 = arith.constant dense<0.000000e+00> : vector<8xf32>
    %12 = vector.multi_reduction <add>, %11, %cst_6 [1] : vector<8x128xf32> to vector<8xf32>
    %13 = vector.shape_cast %12 : vector<8xf32> to vector<8x1xf32>
    %cst_7 = arith.constant 1.000000e+00 : f32
    %14 = vector.broadcast %cst_7 : f32 to vector<8x1xf32>
    %15 = arith.addf %13, %14 : vector<8x1xf32>
    %cst_8 = arith.constant 0.000000e+00 : f32
    %16 = vector.broadcast %cst_8 : f32 to vector<8x1xf32>
    %17 = arith.maximumf %15, %16 : vector<8x1xf32>
    %c1_i32 = arith.constant 1 : i32
    %18 = arith.muli %arg0, %c1_i32 : i32
    %19 = arith.addi %18, %arg1 : i32
    %c8_i32 = arith.constant 8 : i32
    %20 = arith.muli %19, %c8_i32 : i32
    %c8_i32_9 = arith.constant 8 : i32
    %21 = arith.subi %c8_i32_9, %20 : i32
    %22 = tpu.iota {dimensions = array<i32: 0>} : vector<8x1xi32>
    %23 = vector.broadcast %21 : i32 to vector<8x1xi32>
    %24 = arith.cmpi slt, %22, %23 : vector<8x1xi32>
    %cst_10 = arith.constant 0.000000e+00 : f32
    %25 = vector.broadcast %cst_10 : f32 to vector<8x1xf32>
    %26 = arith.select %24, %17, %25 : vector<8x1xi1>, vector<8x1xf32>
    %c0_11 = arith.constant 0 : index
    %c0_12 = arith.constant 0 : index
    %27 = vector.load %arg6[%c0_11, %c0_12] : memref<1x1xf32, #tpu.memory_space<vmem>>, vector<1x1xf32>
    %cst_13 = arith.constant dense<0.000000e+00> : vector<1xf32>
    %28 = vector.multi_reduction <add>, %26, %cst_13 [0] : vector<8x1xf32> to vector<1xf32>
    %29 = vector.shape_cast %28 : vector<1xf32> to vector<1x1xf32>
    %30 = arith.addf %27, %29 : vector<1x1xf32>
    %c0_14 = arith.constant 0 : index
    %c0_15 = arith.constant 0 : index
    %31 = vector.load %arg6[%c0_14, %c0_15] : memref<1x1xf32, #tpu.memory_space<vmem>>, vector<1x1xf32>
    tpu.vector_store %arg6[%c0_14, %c0_15], %30 {strides = array<i32>} : memref<1x1xf32, #tpu.memory_space<vmem>>, vector<1x1xf32>,
    %c0_i32_16 = arith.constant 0 : i32
    %32 = arith.cmpi eq, %arg1, %c0_i32_16 : i32
    %33 = arith.extui %32 : i1 to i32
    %c0_i32_17 = arith.constant 0 : i32
    %34 = arith.cmpi ne, %33, %c0_i32_17 : i32
    scf.if %34 {
      %c0_18 = arith.constant 0 : index
      %c0_19 = arith.constant 0 : index
      %35 = vector.load %arg6[%c0_18, %c0_19] : memref<1x1xf32, #tpu.memory_space<vmem>>, vector<1x1xf32>
      %cst_20 = arith.constant 1.250000e-01 : f32
      %36 = vector.broadcast %cst_20 : f32 to vector<1x1xf32>
      %37 = arith.mulf %35, %36 : vector<1x1xf32>
      %38 = vector.shape_cast %37 : vector<1x1xf32> to vector<1x1x1xf32>
      %c0_21 = arith.constant 0 : index
      %c0_22 = arith.constant 0 : index
      %c0_23 = arith.constant 0 : index
      %39 = vector.load %arg5[%c0_21, %c0_22, %c0_23] : memref<1x1x1xf32, #tpu.memory_space<vmem>>, vector<1x1x1xf32>
      tpu.vector_store %arg5[%c0_21, %c0_22, %c0_23], %38 {strides = array<i32>} : memref<1x1x1xf32, #tpu.memory_space<vmem>>, vector<1x1x1xf32>,
    } else {
    }
    return
  }
  func.func @transform_0(%arg0: i32, %arg1: i32) -> (i32, i32) {
    %c1_i32 = arith.constant 1 : i32
    %0 = arith.muli %arg0, %c1_i32 : i32
    %1 = arith.addi %0, %arg1 : i32
    %c0_i32 = arith.constant 0 : i32
    %2 = arith.minsi %1, %c0_i32 : i32
    %c0_i32_0 = arith.constant 0 : i32
    %c0_i32_1 = arith.constant 0 : i32
    return %2, %c0_i32_0 : i32, i32
  }
  func.func @transform_1(%arg0: i32, %arg1: i32) -> (i32, i32) {
    %c1_i32 = arith.constant 1 : i32
    %0 = arith.muli %arg0, %c1_i32 : i32
    %1 = arith.addi %0, %arg1 : i32
    %c0_i32 = arith.constant 0 : i32
    %2 = arith.minsi %1, %c0_i32 : i32
    %c0_i32_0 = arith.constant 0 : i32
    %c0_i32_1 = arith.constant 0 : i32
    return %2, %c0_i32_0 : i32, i32
  }
  func.func @transform_2(%arg0: i32, %arg1: i32) -> (i32, i32) {
    %c1_i32 = arith.constant 1 : i32
    %0 = arith.muli %arg0, %c1_i32 : i32
    %1 = arith.addi %0, %arg1 : i32
    %c0_i32 = arith.constant 0 : i32
    %2 = arith.minsi %1, %c0_i32 : i32
    %c0_i32_0 = arith.constant 0 : i32
    %c0_i32_1 = arith.constant 0 : i32
    return %2, %c0_i32_0 : i32, i32
  }
  func.func @transform_3(%arg0: i32, %arg1: i32) -> (i32, i32, i32) {
    %c0_i32 = arith.constant 0 : i32
    %c0_i32_0 = arith.constant 0 : i32
    %c0_i32_1 = arith.constant 0 : i32
    return %arg0, %c0_i32, %c0_i32_0 : i32, i32, i32
  }
}

</mosaic_0001>

<llo_original>
// kernel: tpu_custom_call.1
$region0: #{tpu_custom_call.1}
  #allocation0 [shape = 'u32[]', space=smem, size = 0x4, offset = 0x4, fixed_abs, tag = 'smem constant byte address 0x4 - core index']
  #allocation1 [shape = 'u32[144,128]{1,0:T(1,128)}', space=vmem, size = 0x12000, scoped, tag = 'internal scratch']
  #allocation2 [shape = 'f32[1,1]{1,0:T(1,128)}', space=vmem, size = 0x200, scoped, tag = 'scratch operand']
  %s0 = inlined_call_operand.hbm [shape: f32[8,128], index: 0, kind: input, shape index: {}]
  %s1 = inlined_call_operand.hbm [shape: f32[8,128], index: 1, kind: input, shape index: {}]
  %s2 = inlined_call_operand.hbm [shape: f32[8,128], index: 2, kind: input, shape index: {}]
  %s3 = inlined_call_operand.hbm [shape: f32[1,1,1], index: 3, kind: output, shape index: {}]
  %s4 = sld [smem:[#allocation0]]
  $region42: #{tpu_custom_call.1} parent=0
    _
  %s6 = ssub.s32 1, %s4
  %s7 = scalar_select 0, %s6, %s4
  $region1: #{tpu_custom_call.1} parent=0
    #allocation3 [shape = 'u8[4096]{0}', space=vmem, size = 0x1000, scoped, tag = 'input window, operand 0, single buffered']
    #allocation4 [shape = 's32[1]{0}', space=sflag, size = 0x4, scoped, tag = 'scoped memory for tpu_custom_call.1']
    #allocation5 [shape = 's32[1]{0}', space=sflag, size = 0x4, scoped, tag = 'scoped memory for tpu_custom_call.1']
    #allocation6 [shape = 'u8[4096]{0}', space=vmem, size = 0x1000, scoped, tag = 'input window, operand 1, single buffered']
    #allocation7 [shape = 's32[1]{0}', space=sflag, size = 0x4, scoped, tag = 'scoped memory for tpu_custom_call.1']
    #allocation8 [shape = 'u8[4096]{0}', space=vmem, size = 0x1000, scoped, tag = 'input window, operand 2, single buffered']
    #allocation9 [shape = 'u8[512]{0}', space=vmem, size = 0x400, scoped, tag = 'output window, operand 0, single buffered']
    %8 = vsyncpa [#allocation4], 0
    %9 = vsyncpa [#allocation7], 0
    %10 = vsyncpa [#allocation5], 0
    // Predicated region
    $region2: #{tpu_custom_call.1} parent=1 // pred_check
      _
    $region3: #{tpu_custom_call.1} parent=1 // pred_check_branch
      %12 = sbr.rel (0) target = $region5
    $region4: #{tpu_custom_call.1} parent=1 // pred_region
      %s13 = sadd.s32 0, 0
      %p14 = scmp.lt.s32.totalorder %s13, 0
      %s15 = scalar_select %p14, %s13, 0
      %s17 = ssub.s32 128, 128
      %18 = vsyncadd [#allocation4], %s17
      %s19 = smul.addr %s15, 128
      %s20 = scalar_lea.hbm %s0, %s19
      %s22 = sshll.u32 [#allocation3], 4
      %s23 = int_to_ptr.vmem [resolvable:$true] %s22
      %25 = dma.hbm_to_vmem [thread:$0]  %s20, 128, %s23, [#allocation4]
    $region5: #{tpu_custom_call.1} parent=1 // pred_fallthru
      _
    // Predicated region
    $region6: #{tpu_custom_call.1} parent=1 // pred_check
      _
    $region7: #{tpu_custom_call.1} parent=1 // pred_check_branch
      %27 = sbr.rel (0) target = $region9
    $region8: #{tpu_custom_call.1} parent=1 // pred_region
      %s28 = sadd.s32 0, 0
      %p29 = scmp.lt.s32.totalorder %s28, 0
      %s30 = scalar_select %p29, %s28, 0
      %s32 = ssub.s32 128, 128
      %33 = vsyncadd [#allocation7], %s32
      %s34 = smul.addr %s30, 128
      %s35 = scalar_lea.hbm %s1, %s34
      %s37 = sshll.u32 [#allocation6], 4
      %s38 = int_to_ptr.vmem [resolvable:$true] %s37
      %40 = dma.hbm_to_vmem [thread:$0]  %s35, 128, %s38, [#allocation7]
    $region9: #{tpu_custom_call.1} parent=1 // pred_fallthru
      _
    // Predicated region
    $region10: #{tpu_custom_call.1} parent=1 // pred_check
      _
    $region11: #{tpu_custom_call.1} parent=1 // pred_check_branch
      %42 = sbr.rel (0) target = $region13
    $region12: #{tpu_custom_call.1} parent=1 // pred_region
      %s43 = sadd.s32 0, 0
      %p44 = scmp.lt.s32.totalorder %s43, 0
      %s45 = scalar_select %p44, %s43, 0
      %s47 = ssub.s32 128, 128
      %48 = vsyncadd [#allocation7], %s47
      %s49 = smul.addr %s45, 128
      %s50 = scalar_lea.hbm %s2, %s49
      %s52 = sshll.u32 [#allocation8], 4
      %s53 = int_to_ptr.vmem [resolvable:$true] %s52
      %55 = dma.hbm_to_vmem [thread:$0]  %s50, 128, %s53, [#allocation7]
    $region13: #{tpu_custom_call.1} parent=1 // pred_fallthru
      _
    // Predicated region
    $region14: #{tpu_custom_call.1} parent=1 // pred_check
      _
    $region15: #{tpu_custom_call.1} parent=1 // pred_check_branch
      %57 = sbr.rel (0) target = $region17
    $region16: #{tpu_custom_call.1} parent=1 // pred_region
      %58 = dma.done [#allocation4], 128
    $region17: #{tpu_custom_call.1} parent=1 // pred_fallthru
      _
    // Predicated region
    $region18: #{tpu_custom_call.1} parent=1 // pred_check
      _
    $region19: #{tpu_custom_call.1} parent=1 // pred_check_branch
      %60 = sbr.rel (0) target = $region21
    $region20: #{tpu_custom_call.1} parent=1 // pred_region
      %61 = dma.done [#allocation7], 128
    $region21: #{tpu_custom_call.1} parent=1 // pred_fallthru
      _
    // Predicated region
    $region22: #{tpu_custom_call.1} parent=1 // pred_check
      _
    $region23: #{tpu_custom_call.1} parent=1 // pred_check_branch
      %63 = sbr.rel (0) target = $region25
    $region24: #{tpu_custom_call.1} parent=1 // pred_region
      %64 = dma.done [#allocation7], 128
    $region25: #{tpu_custom_call.1} parent=1 // pred_fallthru
      _
    %s65 = sadd.s32 0, 0
    %p66 = scmp.lt.s32.totalorder %s65, 0
    %s67 = scalar_select %p66, %s65, 0
    %s68 = sadd.s32 0, 0
    %p69 = scmp.lt.s32.totalorder %s68, 0
    %s70 = scalar_select %p69, %s68, 0
    %s71 = sadd.s32 0, 0
    %p72 = scmp.lt.s32.totalorder %s71, 0
    %s73 = scalar_select %p72, %s71, 0
    %p74 = scmp.eq.s32.totalorder 0, 0
    // Predicated region
    $region26: #{tpu_custom_call.1} parent=1 // pred_check
      %p75 = pneg %p74
    $region27: #{tpu_custom_call.1} parent=1 // pred_check_branch
      %77 = sbr.rel (%p75) target = $region29
    $region28: #{tpu_custom_call.1} parent=1 // pred_region
      %vm78 = vcmask 0
      %79 = vst.msk [vmem:[#allocation2] sm:$0x1] %vm78, 0.0
    $region29: #{tpu_custom_call.1} parent=1 // pred_fallthru
      _
    %v80 = vld [vmem:[#allocation3] sm:$0xff]
    %v81 = vld [vmem:[#allocation6] sm:$0xff]
    %v82 = vld [vmem:[#allocation8] sm:$0xff]
    %v83 = vsub.f32 %v81, %v82
    %v84 = vadd.f32 %v81, %v82
    %v85 = vmul.f32 %v80, 2.0
    %v86 = vsub.f32 %v84, %v85
    %v87 = vmul.f32 %v83, %v86
    %88 = vadd.xlane.f32.xlu0 %v87
    %v89 = vpop.xlane.xlu0 %88
    %v90 = vadd.f32 %v89, 1.0
    %v91 = vmax.f32 %v90, 0.0
    %s92 = sadd.s32 0, 0
    %s93 = smul.u32 %s92, 8
    %s94 = ssub.s32 8, %s93
    %v95 = vlaneseq
    %v96 = vshrl.u32 %v95, 7
    %v97 = vstv %s94
    %vm98 = vcmp.lt.s32.totalorder %v96, %v97
    %v99 = vsel %vm98, %v91, 0.0
    %v100 = vld [vmem:[#allocation2] sm:$0x1]
    %v101 = vrot.slane %v99, 4
    %v102 = vadd.f32 %v99, %v101
    %v103 = vrot.slane %v102, 2
    %v104 = vadd.f32 %v102, %v103
    %v105 = vrot.slane %v104, 1
    %v106 = vadd.f32 %v104, %v105
    %v107 = vadd.f32 %v100, %v106
    %vm108 = vcmask 0
    %109 = vst.msk [vmem:[#allocation2] sm:$0x1] %vm108, %v107
    // Predicated region
    $region30: #{tpu_custom_call.1} parent=1 // pred_check
      %p110 = pneg %p74
    $region31: #{tpu_custom_call.1} parent=1 // pred_check_branch
      %112 = sbr.rel (%p110) target = $region33
    $region32: #{tpu_custom_call.1} parent=1 // pred_region
      %v113 = vld [vmem:[#allocation2] sm:$0x1]
      %v114 = vmul.f32 %v113, 0.125
      %115 = vst.msk [vmem:[#allocation9] sm:$0x1] %vm108, %v114
    $region33: #{tpu_custom_call.1} parent=1 // pred_fallthru
      _
    // Predicated region
    $region34: #{tpu_custom_call.1} parent=1 // pred_check
      _
    $region35: #{tpu_custom_call.1} parent=1 // pred_check_branch
      %117 = sbr.rel (0) target = $region37
    $region36: #{tpu_custom_call.1} parent=1 // pred_region
      %s119 = ssub.s32 16, 16
      %120 = vsyncadd [#allocation5], %s119
      %s122 = sshll.u32 [#allocation9], 4
      %s123 = int_to_ptr.vmem [resolvable:$true] %s122
      %125 = dma.vmem_to_hbm [thread:$0]  %s123, 16, %s3, [#allocation5]
    $region37: #{tpu_custom_call.1} parent=1 // pred_fallthru
      _
    // Predicated region
    $region38: #{tpu_custom_call.1} parent=1 // pred_check
      _
    $region39: #{tpu_custom_call.1} parent=1 // pred_check_branch
      %127 = sbr.rel (0) target = $region41
    $region40: #{tpu_custom_call.1} parent=1 // pred_region
      %128 = dma.done [#allocation5], 16
    $region41: #{tpu_custom_call.1} parent=1 // pred_fallthru
      _
    %129 = vsyncpa [#allocation4], 1
    %130 = vsyncpa [#allocation7], 1
    %131 = vsyncpa [#allocation5], 1

</llo_original>
